<compile_context>
chip_gen: v5e
topology: v5e:2x2
jax: 0.10.0
libtpu: 0.0.40
codegen_flags: <defaults>
</compile_context>

<pallas_src>
import math

import jax
import jax.numpy as jnp
from jax import lax
from jax.experimental import pallas as pl
from jax.experimental.pallas import tpu as pltpu

_LOG_PROB_MIN = math.log(1e-8)   # clamp(min=1e-8) applied in log-space
_NEG_BIG = -1e30                 # bias pad (finite, bf16-representable): exp -> 0, never wins max
_M_INIT = -3.0e38                # finite running-max init (avoids -inf - -inf NaN edge cases)


def _round_up(x: int, m: int) -> int:
    return ((x + m - 1) // m) * m


def _cdiv(a: int, b: int) -> int:
    return -(-a // b)


def _vmem_capacity_bytes() -> int:
    """Generation-aware VMEM capacity (v5e/v6e: 128 MiB, v7x: 64 MiB)."""
    try:
        info = pltpu.get_tpu_info()
        return int(getattr(info, "vmem_capacity_bytes", 64 * 1024 * 1024))
    except Exception:
        return 64 * 1024 * 1024   # conservative (v7x-sized) fallback


def _pick_tile_n(num_items: int, emb_dim: int, batch: int, vmem_cap: int) -> int:
    """Item-axis tile width: lane-multiple, sized so each double-buffered bf16
    (D, TILE_N) buffer is a few MiB (amortizes per-grid-step overhead) while
    staying well inside the per-generation VMEM budget."""
    n_lane = _round_up(num_items, 128)
    per_buffer_budget = min(4 * 1024 * 1024, max(vmem_cap // 16, 256 * 1024))
    t = per_buffer_budget // (2 * emb_dim)                    # bf16 bytes per item column
    t = min(t, (4 * 1024 * 1024) // (4 * max(batch, 1)))      # keep (B, TILE_N) f32 logits small
    t = max(512, min(32768, t))
    t = (t // 128) * 128
    return min(t, n_lane)


def _block_spec(shape, index_map, *, buffered=None):
    """BlockSpec, optionally with deeper multi-buffering (guarded: falls back
    to default double-buffering if pipeline_mode is unavailable)."""
    if buffered is not None:
        try:
            return pl.BlockSpec(shape, index_map, pipeline_mode=pl.Buffered(buffered))
        except (TypeError, AttributeError):
            pass
    return pl.BlockSpec(shape, index_map)


def _generator_lse_kernel(flags_ref,        # scalar-prefetch (SMEM): per-tile sample-hit flags
                          u_ref,            # (B, D)        bf16
                          items_ref,        # (D, TILE_N)   bf16
                          bias_ref,         # (1, TILE_N)   bf16
                          sample_ref,       # (B, S)        int32
                          m_out,            # (1, B, 1)     f32   per-split running max
                          se_out,           # (1, B, 1)     f32   per-split sum-exp
                          samp_out,         # (1, B, S)     f32   per-split gathered sample logits
                          m_sc,             # (B, 1)        f32   scratch
                          se_sc,            # (B, 1)        f32   scratch
                          samp_sc):         # (B, S)        f32   scratch
    h = pl.program_id(0)              # item-axis split ("parallel": megacore sharding on v7x)
    n = pl.program_id(1)              # tile within the split ("arbitrary" reduction axis)
    n_inner = pl.num_programs(1)
    tile_n = items_ref.shape[1]
    n_samples = sample_ref.shape[1]

    @pl.when(n == 0)
    def _init():
        m_sc[...] = jnp.full_like(m_sc, _M_INIT)
        se_sc[...] = jnp.zeros_like(se_sc)
        samp_sc[...] = jnp.zeros_like(samp_sc)

    # Lane-dense (B, TILE_N) logits: bf16 x bf16 MXU matmul, f32 accumulate,
    # plus the bf16-streamed bias.
    logits = jnp.dot(u_ref[...], items_ref[...],
                     preferred_element_type=jnp.float32)
    logits = logits + bias_ref[...].astype(jnp.float32)

    # --- online log-sum-exp over the item axis (per user row) ---
    m_old = m_sc[...]                                                  # (B, 1)
    m_new = jnp.maximum(m_old, jnp.max(logits, axis=-1, keepdims=True))
    se_sc[...] = se_sc[...] * jnp.exp(m_old - m_new) + \
        jnp.sum(jnp.exp(logits - m_new), axis=-1, keepdims=True)
    m_sc[...] = m_new

    # --- accumulate logits[b, sample[b, s]] for samples in this tile ---
    # Entire block is skipped (scalar-prefetched flag) on sample-free tiles.
    tile_id = h * n_inner + n

    @pl.when(flags_ref[tile_id] != 0)
    def _gather():
        base = tile_id * tile_n
        iota = lax.broadcasted_iota(jnp.int32, (1, tile_n), 1)         # local lane iota
        smp = sample_ref[...] - base                                   # (B, S)
        cols = []
        for s in range(n_samples):                                     # S is small & static
            hit = iota == smp[:, s:s + 1]                              # (B, TILE_N) bool
            cols.append(jnp.sum(jnp.where(hit, logits, 0.0),
                                axis=-1, keepdims=True))               # (B, 1)
        samp_sc[...] += jnp.concatenate(cols, axis=-1)                 # (B, S)

    @pl.when(n == n_inner - 1)
    def _finalize():
        m_out[0] = m_sc[...]
        se_out[0] = se_sc[...]
        samp_out[0] = samp_sc[...]


def generator_forward_losses(user_embeddings, item_embeddings, item_bias,
                             user_indices, samples, rewards, *, tile_n=None):
    """Batched Pallas-backed Generator.forward: one streamed pass over the
    item table amortized over B users; returns (B,) losses."""
    num_users, emb_dim = user_embeddings.shape
    num_items = item_embeddings.shape[0]
    assert num_items >= 1 and emb_dim >= 1, "empty item table / embedding dim"

    user_indices = jnp.asarray(user_indices, jnp.int32).reshape(-1)
    samples = jnp.asarray(samples, jnp.int32)
    rewards = jnp.asarray(rewards, jnp.float32)
    if samples.ndim == 1:
        samples = samples[None]
    if rewards.ndim == 1:
        rewards = rewards[None]
    batch, n_samples = samples.shape
    assert n_samples >= 1
    assert rewards.shape == (batch, n_samples)
    assert user_indices.shape[0] == batch

    # ---- tiling (generation-aware) ----
    vmem_cap = _vmem_capacity_bytes()
    if tile_n is None:
        tile_n = _pick_tile_n(num_items, emb_dim, batch, vmem_cap)
    tile_n = max(128, (int(tile_n) // 128) * 128)
    tile_n = min(tile_n, _round_up(num_items, 128))

    n_tiles = _cdiv(num_items, tile_n)
    # Leading size-2 "parallel" split of the item axis: on v7x both TensorCores
    # stream half the table concurrently; partial stats combined below.
    n_splits = 2 if n_tiles >= 2 else 1
    grid_inner = _cdiv(n_tiles, n_splits)
    n_pad = n_splits * grid_inner * tile_n
    n_total_tiles = n_splits * grid_inner

    # ---- one-time layout plumbing (plain JAX) ----
    # TODO(synk): in a training loop, store the item table pre-transposed /
    # pre-padded so this per-call transpose+pad disappears.
    items_t = item_embeddings.astype(jnp.bfloat16).T                     # (D, N) lane-dense
    items_t = jnp.pad(items_t, ((0, 0), (0, n_pad - num_items)))
    bias2d = item_bias.astype(jnp.bfloat16).reshape(1, num_items)        # bf16 stream
    bias2d = jnp.pad(bias2d, ((0, 0), (0, n_pad - num_items)),
                     constant_values=_NEG_BIG)                           # pad lanes -> exp == 0
    u_rows = user_embeddings.astype(jnp.bfloat16)[user_indices]          # (B, D) tiny gather

    # Per-tile "does any sample land here" flags, scalar-prefetched into SMEM.
    flags = jnp.zeros((n_total_tiles,), jnp.int32)
    flags = flags.at[samples.reshape(-1) // tile_n].set(1)

    small_tiles = (2 * emb_dim * tile_n) < (512 * 1024) and grid_inner >= 4
    buffered = 3 if small_tiles else None

    grid_spec = pltpu.PrefetchScalarGridSpec(
        num_scalar_prefetch=1,
        grid=(n_splits, grid_inner),
        in_specs=[
            pl.BlockSpec((batch, emb_dim), lambda h, n, _: (0, 0)),
            _block_spec((emb_dim, tile_n),
                        lambda h, n, _: (0, h * grid_inner + n),
                        buffered=buffered),
            _block_spec((1, tile_n),
                        lambda h, n, _: (0, h * grid_inner + n),
                        buffered=buffered),
            pl.BlockSpec((batch, n_samples), lambda h, n, _: (0, 0)),
        ],
        out_specs=[
            pl.BlockSpec((1, batch, 1), lambda h, n, _: (h, 0, 0)),
            pl.BlockSpec((1, batch, 1), lambda h, n, _: (h, 0, 0)),
            pl.BlockSpec((1, batch, n_samples), lambda h, n, _: (h, 0, 0)),
        ],
        scratch_shapes=[
            pltpu.VMEM((batch, 1), jnp.float32),           # running max
            pltpu.VMEM((batch, 1), jnp.float32),           # running sum-exp
            pltpu.VMEM((batch, n_samples), jnp.float32),   # gathered sample logits
        ],
    )

    item_stream_bytes = 2 * emb_dim * n_pad + 2 * n_pad     # bf16 items + bf16 bias
    cost = pl.CostEstimate(
        flops=2 * batch * emb_dim * n_pad,
        transcendentals=batch * n_pad,
        bytes_accessed=item_stream_bytes + 2 * batch * emb_dim
        + 4 * batch * n_samples + 4 * n_total_tiles,
    )

    # v5e/v6e (128 MiB VMEM) -> 64 MiB scoped; v7x (64 MiB) -> 32 MiB scoped.
    vmem_limit = int(min(64 * 1024 * 1024, max(vmem_cap // 2, 16 * 1024 * 1024)))

    m_parts, se_parts, samp_parts = pl.pallas_call(
        _generator_lse_kernel,
        out_shape=(
            jax.ShapeDtypeStruct((n_splits, batch, 1), jnp.float32),
            jax.ShapeDtypeStruct((n_splits, batch, 1), jnp.float32),
            jax.ShapeDtypeStruct((n_splits, batch, n_samples), jnp.float32),
        ),
        grid_spec=grid_spec,
        compiler_params=pltpu.CompilerParams(
            dimension_semantics=("parallel", "arbitrary"),
            vmem_limit_bytes=vmem_limit,
        ),
        cost_estimate=cost,
    )(flags, u_rows, items_t, bias2d, samples)

    # ---- combine the per-split partial LSE / sample-logit stats (tiny) ----
    m = jnp.max(m_parts, axis=0)                                        # (B, 1)
    se = jnp.sum(se_parts * jnp.exp(m_parts - m), axis=0)               # (B, 1)
    lse = m + jnp.log(se)                                               # (B, 1)
    samp_logits = jnp.sum(samp_parts, axis=0)                           # (B, S)
    logp = jnp.maximum(samp_logits - lse, jnp.float32(_LOG_PROB_MIN))   # == log(clamp(p, 1e-8))
    return -jnp.mean(logp * rewards, axis=-1)                           # (B,)


def generator_forward_loss(user_embeddings, item_embeddings, item_bias,
                           user_index, sample, reward, *, tile_n=None):
    """Pallas-backed equivalent of Generator.forward(user_index, sample, reward)."""
    losses = generator_forward_losses(
        user_embeddings, item_embeddings, item_bias,
        jnp.asarray(user_index, jnp.int32).reshape(1),
        jnp.asarray(sample, jnp.int32).reshape(1, -1),
        jnp.asarray(reward, jnp.float32).reshape(1, -1),
        tile_n=tile_n)
    return losses[0]


def _reference_losses(user_embeddings, item_embeddings, item_bias,
                      user_indices, samples, rewards):
    """Pure-JAX f32 reference over the same stored parameters."""
    u = user_embeddings[user_indices].astype(jnp.float32)               # (B, D)
    items = item_embeddings.astype(jnp.float32)                         # (N, D)
    logits = u @ items.T + item_bias.astype(jnp.float32)[None, :]       # (B, N)
    sm = jax.nn.softmax(logits, axis=-1)
    probs = jnp.maximum(jnp.take_along_axis(sm, samples, axis=-1), 1e-8)
    return -jnp.mean(jnp.log(probs) * rewards, axis=-1)


if __name__ == "__main__":
    # MovieLens-like synthetic setup (num_items not a tile multiple to exercise
    # padding; tile_n=128 in the first test to exercise the multi-tile,
    # 2-way-split and hit-flag-gating paths).
    num_users, num_items, emb_dim, num_samples = 16, 500, 32, 8

    key = jax.random.PRNGKey(0)
    (k_user, k_item, k_bias, k_sample, k_reward,
     k_uidx, k_bsample, k_breward) = jax.random.split(key, 8)

    G_user_embeddings = (jax.random.normal(k_user, (num_users, emb_dim), jnp.float32)
                         * 0.1).astype(jnp.bfloat16)
    G_item_embeddings = (jax.random.normal(k_item, (num_items, emb_dim), jnp.float32)
                         * 0.1).astype(jnp.bfloat16)
    G_item_bias = jax.random.normal(k_bias, (num_items,), jnp.float32) * 0.01

    # --- single-user forward (the module contract) ---
    user_index = jnp.int32(3)
    sample = jax.random.randint(k_sample, (num_samples,), 0, num_items, jnp.int32)
    reward = jax.random.uniform(k_reward, (num_samples,), jnp.float32)

    loss = generator_forward_loss(G_user_embeddings, G_item_embeddings, G_item_bias,
                                  user_index, sample, reward, tile_n=128)
    loss = jax.block_until_ready(loss)
    ref = _reference_losses(G_user_embeddings, G_item_embeddings, G_item_bias,
                            jnp.asarray([3], jnp.int32),
                            sample[None], reward[None])[0]
    assert jnp.isfinite(loss), "single-user loss is not finite"
    assert abs(float(loss) - float(ref)) < 2e-3, (float(loss), float(ref))

    # --- batched path (one item-table pass amortized over B losses),
    #     adaptive tile size (single wide tile here) ---
    B = 4
    user_indices = jax.random.randint(k_uidx, (B,), 0, num_users, jnp.int32)
    samples = jax.random.randint(k_bsample, (B, num_samples), 0, num_items, jnp.int32)
    rewards = jax.random.uniform(k_breward, (B, num_samples), jnp.float32)

    losses = generator_forward_losses(G_user_embeddings, G_item_embeddings, G_item_bias,
                                      user_indices, samples, rewards)
    losses = jax.block_until_ready(losses)
    refs = _reference_losses(G_user_embeddings, G_item_embeddings, G_item_bias,
                             user_indices, samples, rewards)
    assert bool(jnp.all(jnp.isfinite(losses))), "batched losses are not finite"
    assert float(jnp.max(jnp.abs(losses - refs))) < 2e-3, (losses, refs)

    print("KERNEL_OK")
</pallas_src>

<mosaic_0001>
module attributes {stable_mosaic.version = 11 : i64} {
  func.func @_generator_lse_kernel(%arg0: i32, %arg1: i32, %arg2: memref<4xi32, #tpu.memory_space<smem>>, %arg3: memref<1x32xbf16, #tpu.memory_space<vmem>>, %arg4: memref<32x128xbf16, #tpu.memory_space<vmem>>, %arg5: memref<1x128xbf16, #tpu.memory_space<vmem>>, %arg6: memref<1x8xi32, #tpu.memory_space<vmem>>, %arg7: memref<1x1x1xf32, #tpu.memory_space<vmem>>, %arg8: memref<1x1x1xf32, #tpu.memory_space<vmem>>, %arg9: memref<1x1x8xf32, #tpu.memory_space<vmem>>, %arg10: memref<1x1xf32, #tpu.memory_space<vmem>>, %arg11: memref<1x1xf32, #tpu.memory_space<vmem>>, %arg12: memref<1x8xf32, #tpu.memory_space<vmem>>) attributes {dimension_semantics = [#tpu.dimension_semantics<parallel>, #tpu.dimension_semantics<arbitrary>], iteration_bounds = array<i64: 2, 2>, scalar_prefetch = 1 : i64, scratch_operands = 3 : i64, tpu.core_type = #tpu.core_type<tc>, window_params = [{pipeline_mode = #tpu.pipeline_mode<synchronous>, transform_indices = @transform_0, window_bounds = array<i64: 1, 32>}, {transform_indices = @transform_1, window_bounds = array<i64: 32, 128>}, {transform_indices = @transform_2, window_bounds = array<i64: 1, 128>}, {pipeline_mode = #tpu.pipeline_mode<synchronous>, transform_indices = @transform_3, window_bounds = array<i64: 1, 8>}, {transform_indices = @transform_4, window_bounds = array<i64: 1, 1, 1>}, {transform_indices = @transform_5, window_bounds = array<i64: 1, 1, 1>}, {transform_indices = @transform_6, window_bounds = array<i64: 1, 1, 8>}]} {
    %c0_i32 = arith.constant 0 : i32
    %0 = arith.cmpi eq, %arg1, %c0_i32 : i32
    %1 = arith.extui %0 : i1 to i32
    %c0_i32_0 = arith.constant 0 : i32
    %2 = arith.cmpi ne, %1, %c0_i32_0 : i32
    scf.if %2 {
      %cst_19 = arith.constant -3.000000e+38 : f32
      %35 = vector.broadcast %cst_19 : f32 to vector<1x1xf32>
      %c0_20 = arith.constant 0 : index
      %c0_21 = arith.constant 0 : index
      %36 = vector.load %arg10[%c0_20, %c0_21] : memref<1x1xf32, #tpu.memory_space<vmem>>, vector<1x1xf32>
      tpu.vector_store %arg10[%c0_20, %c0_21], %35 {strides = array<i32>} : memref<1x1xf32, #tpu.memory_space<vmem>>, vector<1x1xf32>,
      %cst_22 = arith.constant 0.000000e+00 : f32
      %37 = vector.broadcast %cst_22 : f32 to vector<1x1xf32>
      %c0_23 = arith.constant 0 : index
      %c0_24 = arith.constant 0 : index
      %38 = vector.load %arg11[%c0_23, %c0_24] : memref<1x1xf32, #tpu.memory_space<vmem>>, vector<1x1xf32>
      tpu.vector_store %arg11[%c0_23, %c0_24], %37 {strides = array<i32>} : memref<1x1xf32, #tpu.memory_space<vmem>>, vector<1x1xf32>,
      %cst_25 = arith.constant 0.000000e+00 : f32
      %39 = vector.broadcast %cst_25 : f32 to vector<1x8xf32>
      %c0_26 = arith.constant 0 : index
      %c0_27 = arith.constant 0 : index
      %40 = vector.load %arg12[%c0_26, %c0_27] : memref<1x8xf32, #tpu.memory_space<vmem>>, vector<1x8xf32>
      tpu.vector_store %arg12[%c0_26, %c0_27], %39 {strides = array<i32>} : memref<1x8xf32, #tpu.memory_space<vmem>>, vector<1x8xf32>,
    } else {
    }
    %c0 = arith.constant 0 : index
    %c0_1 = arith.constant 0 : index
    %3 = vector.load %arg3[%c0, %c0_1] : memref<1x32xbf16, #tpu.memory_space<vmem>>, vector<1x32xbf16>
    %c0_2 = arith.constant 0 : index
    %c0_3 = arith.constant 0 : index
    %4 = vector.load %arg4[%c0_2, %c0_3] : memref<32x128xbf16, #tpu.memory_space<vmem>>, vector<32x128xbf16>
    %cst = arith.constant dense<0.000000e+00> : vector<1x128xf32>
    %5 = tpu.matmul %3, %4, %cst {dimension_numbers = #tpu.dot_dimension_numbers<[1], [0], [0], [1], [0, 0, 1, 1], [], []>} : vector<1x32xbf16>, vector<32x128xbf16>, vector<1x128xf32> -> vector<1x128xf32>
    %c0_4 = arith.constant 0 : index
    %c0_5 = arith.constant 0 : index
    %6 = vector.load %arg5[%c0_4, %c0_5] : memref<1x128xbf16, #tpu.memory_space<vmem>>, vector<1x128xbf16>
    %7 = arith.extf %6 : vector<1x128xbf16> to vector<1x128xf32>
    %8 = arith.addf %5, %7 : vector<1x128xf32>
    %c0_6 = arith.constant 0 : index
    %c0_7 = arith.constant 0 : index
    %9 = vector.load %arg10[%c0_6, %c0_7] : memref<1x1xf32, #tpu.memory_space<vmem>>, vector<1x1xf32>
    %cst_8 = arith.constant dense<0xFF800000> : vector<1xf32>
    %10 = vector.multi_reduction <maximumf>, %8, %cst_8 [1] : vector<1x128xf32> to vector<1xf32>
    %11 = vector.shape_cast %10 : vector<1xf32> to vector<1x1xf32>
    %12 = arith.maximumf %9, %11 : vector<1x1xf32>
    %c0_9 = arith.constant 0 : index
    %c0_10 = arith.constant 0 : index
    %13 = vector.load %arg11[%c0_9, %c0_10] : memref<1x1xf32, #tpu.memory_space<vmem>>, vector<1x1xf32>
    %14 = arith.subf %9, %12 : vector<1x1xf32>
    %15 = math.exp %14 : vector<1x1xf32>
    %16 = arith.mulf %13, %15 : vector<1x1xf32>
    %17 = vector.broadcast %12 : vector<1x1xf32> to vector<1x128xf32>
    %18 = arith.subf %8, %17 : vector<1x128xf32>
    %19 = math.exp %18 : vector<1x128xf32>
    %cst_11 = arith.constant dense<0.000000e+00> : vector<1xf32>
    %20 = vector.multi_reduction <add>, %19, %cst_11 [1] : vector<1x128xf32> to vector<1xf32>
    %21 = vector.shape_cast %20 : vector<1xf32> to vector<1x1xf32>
    %22 = arith.addf %16, %21 : vector<1x1xf32>
    %c0_12 = arith.constant 0 : index
    %c0_13 = arith.constant 0 : index
    %23 = vector.load %arg11[%c0_12, %c0_13] : memref<1x1xf32, #tpu.memory_space<vmem>>, vector<1x1xf32>
    tpu.vector_store %arg11[%c0_12, %c0_13], %22 {strides = array<i32>} : memref<1x1xf32, #tpu.memory_space<vmem>>, vector<1x1xf32>,
    %c0_14 = arith.constant 0 : index
    %c0_15 = arith.constant 0 : index
    %24 = vector.load %arg10[%c0_14, %c0_15] : memref<1x1xf32, #tpu.memory_space<vmem>>, vector<1x1xf32>
    tpu.vector_store %arg10[%c0_14, %c0_15], %12 {strides = array<i32>} : memref<1x1xf32, #tpu.memory_space<vmem>>, vector<1x1xf32>,
    %c2_i32 = arith.constant 2 : i32
    %25 = arith.muli %arg0, %c2_i32 : i32
    %26 = arith.addi %25, %arg1 : i32
    %27 = arith.index_cast %26 : i32 to index
    %28 = memref.load %arg2[%27] : memref<4xi32, #tpu.memory_space<smem>>
    %c0_i32_16 = arith.constant 0 : i32
    %29 = arith.cmpi ne, %28, %c0_i32_16 : i32
    %30 = arith.extui %29 : i1 to i32
    %c0_i32_17 = arith.constant 0 : i32
    %31 = arith.cmpi ne, %30, %c0_i32_17 : i32
    scf.if %31 {
      %c128_i32 = arith.constant 128 : i32
      %35 = arith.muli %26, %c128_i32 : i32
      %36 = tpu.iota {dimensions = array<i32: 1>} : vector<1x128xi32>
      %c0_19 = arith.constant 0 : index
      %c0_20 = arith.constant 0 : index
      %37 = vector.load %arg6[%c0_19, %c0_20] : memref<1x8xi32, #tpu.memory_space<vmem>>, vector<1x8xi32>
      %38 = vector.broadcast %35 : i32 to vector<1x8xi32>
      %39 = arith.subi %37, %38 : vector<1x8xi32>
      %40 = vector.extract_strided_slice %39 {offsets = [0, 0], sizes = [1, 1], strides = [1, 1]} : vector<1x8xi32> to vector<1x1xi32>
      %41 = vector.broadcast %40 : vector<1x1xi32> to vector<1x128xi32>
      %42 = arith.cmpi eq, %36, %41 : vector<1x128xi32>
      %cst_21 = arith.constant 0.000000e+00 : f32
      %43 = vector.broadcast %cst_21 : f32 to vector<1x128xf32>
      %44 = arith.select %42, %8, %43 : vector<1x128xi1>, vector<1x128xf32>
      %cst_22 = arith.constant dense<0.000000e+00> : vector<1xf32>
      %45 = vector.multi_reduction <add>, %44, %cst_22 [1] : vector<1x128xf32> to vector<1xf32>
      %46 = vector.shape_cast %45 : vector<1xf32> to vector<1x1xf32>
      %47 = vector.extract_strided_slice %39 {offsets = [0, 1], sizes = [1, 1], strides = [1, 1]} : vector<1x8xi32> to vector<1x1xi32>
      %48 = vector.broadcast %47 : vector<1x1xi32> to vector<1x128xi32>
      %49 = arith.cmpi eq, %36, %48 : vector<1x128xi32>
      %cst_23 = arith.constant 0.000000e+00 : f32
      %50 = vector.broadcast %cst_23 : f32 to vector<1x128xf32>
      %51 = arith.select %49, %8, %50 : vector<1x128xi1>, vector<1x128xf32>
      %cst_24 = arith.constant dense<0.000000e+00> : vector<1xf32>
      %52 = vector.multi_reduction <add>, %51, %cst_24 [1] : vector<1x128xf32> to vector<1xf32>
      %53 = vector.shape_cast %52 : vector<1xf32> to vector<1x1xf32>
      %54 = vector.extract_strided_slice %39 {offsets = [0, 2], sizes = [1, 1], strides = [1, 1]} : vector<1x8xi32> to vector<1x1xi32>
      %55 = vector.broadcast %54 : vector<1x1xi32> to vector<1x128xi32>
      %56 = arith.cmpi eq, %36, %55 : vector<1x128xi32>
      %cst_25 = arith.constant 0.000000e+00 : f32
      %57 = vector.broadcast %cst_25 : f32 to vector<1x128xf32>
      %58 = arith.select %56, %8, %57 : vector<1x128xi1>, vector<1x128xf32>
      %cst_26 = arith.constant dense<0.000000e+00> : vector<1xf32>
      %59 = vector.multi_reduction <add>, %58, %cst_26 [1] : vector<1x128xf32> to vector<1xf32>
      %60 = vector.shape_cast %59 : vector<1xf32> to vector<1x1xf32>
      %61 = vector.extract_strided_slice %39 {offsets = [0, 3], sizes = [1, 1], strides = [1, 1]} : vector<1x8xi32> to vector<1x1xi32>
      %62 = vector.broadcast %61 : vector<1x1xi32> to vector<1x128xi32>
      %63 = arith.cmpi eq, %36, %62 : vector<1x128xi32>
      %cst_27 = arith.constant 0.000000e+00 : f32
      %64 = vector.broadcast %cst_27 : f32 to vector<1x128xf32>
      %65 = arith.select %63, %8, %64 : vector<1x128xi1>, vector<1x128xf32>
      %cst_28 = arith.constant dense<0.000000e+00> : vector<1xf32>
      %66 = vector.multi_reduction <add>, %65, %cst_28 [1] : vector<1x128xf32> to vector<1xf32>
      %67 = vector.shape_cast %66 : vector<1xf32> to vector<1x1xf32>
      %68 = vector.extract_strided_slice %39 {offsets = [0, 4], sizes = [1, 1], strides = [1, 1]} : vector<1x8xi32> to vector<1x1xi32>
      %69 = vector.broadcast %68 : vector<1x1xi32> to vector<1x128xi32>
      %70 = arith.cmpi eq, %36, %69 : vector<1x128xi32>
      %cst_29 = arith.constant 0.000000e+00 : f32
      %71 = vector.broadcast %cst_29 : f32 to vector<1x128xf32>
      %72 = arith.select %70, %8, %71 : vector<1x128xi1>, vector<1x128xf32>
      %cst_30 = arith.constant dense<0.000000e+00> : vector<1xf32>
      %73 = vector.multi_reduction <add>, %72, %cst_30 [1] : vector<1x128xf32> to vector<1xf32>
      %74 = vector.shape_cast %73 : vector<1xf32> to vector<1x1xf32>
      %75 = vector.extract_strided_slice %39 {offsets = [0, 5], sizes = [1, 1], strides = [1, 1]} : vector<1x8xi32> to vector<1x1xi32>
      %76 = vector.broadcast %75 : vector<1x1xi32> to vector<1x128xi32>
      %77 = arith.cmpi eq, %36, %76 : vector<1x128xi32>
      %cst_31 = arith.constant 0.000000e+00 : f32
      %78 = vector.broadcast %cst_31 : f32 to vector<1x128xf32>
      %79 = arith.select %77, %8, %78 : vector<1x128xi1>, vector<1x128xf32>
      %cst_32 = arith.constant dense<0.000000e+00> : vector<1xf32>
      %80 = vector.multi_reduction <add>, %79, %cst_32 [1] : vector<1x128xf32> to vector<1xf32>
      %81 = vector.shape_cast %80 : vector<1xf32> to vector<1x1xf32>
      %82 = vector.extract_strided_slice %39 {offsets = [0, 6], sizes = [1, 1], strides = [1, 1]} : vector<1x8xi32> to vector<1x1xi32>
      %83 = vector.broadcast %82 : vector<1x1xi32> to vector<1x128xi32>
      %84 = arith.cmpi eq, %36, %83 : vector<1x128xi32>
      %cst_33 = arith.constant 0.000000e+00 : f32
      %85 = vector.broadcast %cst_33 : f32 to vector<1x128xf32>
      %86 = arith.select %84, %8, %85 : vector<1x128xi1>, vector<1x128xf32>
      %cst_34 = arith.constant dense<0.000000e+00> : vector<1xf32>
      %87 = vector.multi_reduction <add>, %86, %cst_34 [1] : vector<1x128xf32> to vector<1xf32>
      %88 = vector.shape_cast %87 : vector<1xf32> to vector<1x1xf32>
      %89 = vector.extract_strided_slice %39 {offsets = [0, 7], sizes = [1, 1], strides = [1, 1]} : vector<1x8xi32> to vector<1x1xi32>
      %90 = vector.broadcast %89 : vector<1x1xi32> to vector<1x128xi32>
      %91 = arith.cmpi eq, %36, %90 : vector<1x128xi32>
      %cst_35 = arith.constant 0.000000e+00 : f32
      %92 = vector.broadcast %cst_35 : f32 to vector<1x128xf32>
      %93 = arith.select %91, %8, %92 : vector<1x128xi1>, vector<1x128xf32>
      %cst_36 = arith.constant dense<0.000000e+00> : vector<1xf32>
      %94 = vector.multi_reduction <add>, %93, %cst_36 [1] : vector<1x128xf32> to vector<1xf32>
      %95 = vector.shape_cast %94 : vector<1xf32> to vector<1x1xf32>
      %c0_37 = arith.constant 0 : index
      %c0_38 = arith.constant 0 : index
      %96 = vector.load %arg12[%c0_37, %c0_38] : memref<1x8xf32, #tpu.memory_space<vmem>>, vector<1x8xf32>
      %97 = tpu.concatenate %46, %53, %60, %67, %74, %81, %88, %95 in 1 : vector<1x1xf32>, vector<1x1xf32>, vector<1x1xf32>, vector<1x1xf32>, vector<1x1xf32>, vector<1x1xf32>, vector<1x1xf32>, vector<1x1xf32> -> vector<1x8xf32>
      %98 = arith.addf %96, %97 : vector<1x8xf32>
      %c0_39 = arith.constant 0 : index
      %c0_40 = arith.constant 0 : index
      %99 = vector.load %arg12[%c0_39, %c0_40] : memref<1x8xf32, #tpu.memory_space<vmem>>, vector<1x8xf32>
      tpu.vector_store %arg12[%c0_39, %c0_40], %98 {strides = array<i32>} : memref<1x8xf32, #tpu.memory_space<vmem>>, vector<1x8xf32>,
    } else {
    }
    %c1_i32 = arith.constant 1 : i32
    %32 = arith.cmpi eq, %arg1, %c1_i32 : i32
    %33 = arith.extui %32 : i1 to i32
    %c0_i32_18 = arith.constant 0 : i32
    %34 = arith.cmpi ne, %33, %c0_i32_18 : i32
    scf.if %34 {
      %c0_19 = arith.constant 0 : index
      %c0_20 = arith.constant 0 : index
      %35 = vector.load %arg10[%c0_19, %c0_20] : memref<1x1xf32, #tpu.memory_space<vmem>>, vector<1x1xf32>
      %c0_21 = arith.constant 0 : index
      %c0_22 = arith.constant 0 : index
      %c0_23 = arith.constant 0 : index
      %36 = vector.load %arg7[%c0_21, %c0_22, %c0_23] : memref<1x1x1xf32, #tpu.memory_space<vmem>>, vector<1x1x1xf32>
      %37 = vector.shape_cast %36 : vector<1x1x1xf32> to vector<1x1xf32>
      %38 = vector.shape_cast %35 : vector<1x1xf32> to vector<1x1x1xf32>
      tpu.vector_store %arg7[%c0_21, %c0_22, %c0_23], %38 {strides = array<i32>} : memref<1x1x1xf32, #tpu.memory_space<vmem>>, vector<1x1x1xf32>,
      %c0_24 = arith.constant 0 : index
      %c0_25 = arith.constant 0 : index
      %39 = vector.load %arg11[%c0_24, %c0_25] : memref<1x1xf32, #tpu.memory_space<vmem>>, vector<1x1xf32>
      %c0_26 = arith.constant 0 : index
      %c0_27 = arith.constant 0 : index
      %c0_28 = arith.constant 0 : index
      %40 = vector.load %arg8[%c0_26, %c0_27, %c0_28] : memref<1x1x1xf32, #tpu.memory_space<vmem>>, vector<1x1x1xf32>
      %41 = vector.shape_cast %40 : vector<1x1x1xf32> to vector<1x1xf32>
      %42 = vector.shape_cast %39 : vector<1x1xf32> to vector<1x1x1xf32>
      tpu.vector_store %arg8[%c0_26, %c0_27, %c0_28], %42 {strides = array<i32>} : memref<1x1x1xf32, #tpu.memory_space<vmem>>, vector<1x1x1xf32>,
      %c0_29 = arith.constant 0 : index
      %c0_30 = arith.constant 0 : index
      %43 = vector.load %arg12[%c0_29, %c0_30] : memref<1x8xf32, #tpu.memory_space<vmem>>, vector<1x8xf32>
      %c0_31 = arith.constant 0 : index
      %c0_32 = arith.constant 0 : index
      %c0_33 = arith.constant 0 : index
      %44 = vector.load %arg9[%c0_31, %c0_32, %c0_33] : memref<1x1x8xf32, #tpu.memory_space<vmem>>, vector<1x1x8xf32>
      %45 = vector.shape_cast %44 : vector<1x1x8xf32> to vector<1x8xf32>
      %46 = vector.shape_cast %43 : vector<1x8xf32> to vector<1x1x8xf32>
      tpu.vector_store %arg9[%c0_31, %c0_32, %c0_33], %46 {strides = array<i32>} : memref<1x1x8xf32, #tpu.memory_space<vmem>>, vector<1x1x8xf32>,
    } else {
    }
    return
  }
  func.func @transform_0(%arg0: i32, %arg1: i32, %arg2: memref<4xi32, #tpu.memory_space<smem>>) -> (i32, i32) {
    %c0_i32 = arith.constant 0 : i32
    %c0_i32_0 = arith.constant 0 : i32
    %c0_i32_1 = arith.constant 0 : i32
    return %c0_i32, %c0_i32_0 : i32, i32
  }
  func.func @transform_1(%arg0: i32, %arg1: i32, %arg2: memref<4xi32, #tpu.memory_space<smem>>) -> (i32, i32) {
    %c2_i32 = arith.constant 2 : i32
    %0 = arith.muli %arg0, %c2_i32 : i32
    %1 = arith.addi %0, %arg1 : i32
    %c0_i32 = arith.constant 0 : i32
    %c0_i32_0 = arith.constant 0 : i32
    return %c0_i32, %1 : i32, i32
  }
  func.func @transform_2(%arg0: i32, %arg1: i32, %arg2: memref<4xi32, #tpu.memory_space<smem>>) -> (i32, i32) {
    %c2_i32 = arith.constant 2 : i32
    %0 = arith.muli %arg0, %c2_i32 : i32
    %1 = arith.addi %0, %arg1 : i32
    %c0_i32 = arith.constant 0 : i32
    %c0_i32_0 = arith.constant 0 : i32
    return %c0_i32, %1 : i32, i32
  }
  func.func @transform_3(%arg0: i32, %arg1: i32, %arg2: memref<4xi32, #tpu.memory_space<smem>>) -> (i32, i32) {
    %c0_i32 = arith.constant 0 : i32
    %c0_i32_0 = arith.constant 0 : i32
    %c0_i32_1 = arith.constant 0 : i32
    return %c0_i32, %c0_i32_0 : i32, i32
  }
  func.func @transform_4(%arg0: i32, %arg1: i32, %arg2: memref<4xi32, #tpu.memory_space<smem>>) -> (i32, i32, i32) {
    %c0_i32 = arith.constant 0 : i32
    %c0_i32_0 = arith.constant 0 : i32
    %c0_i32_1 = arith.constant 0 : i32
    return %arg0, %c0_i32, %c0_i32_0 : i32, i32, i32
  }
  func.func @transform_5(%arg0: i32, %arg1: i32, %arg2: memref<4xi32, #tpu.memory_space<smem>>) -> (i32, i32, i32) {
    %c0_i32 = arith.constant 0 : i32
    %c0_i32_0 = arith.constant 0 : i32
    %c0_i32_1 = arith.constant 0 : i32
    return %arg0, %c0_i32, %c0_i32_0 : i32, i32, i32
  }
  func.func @transform_6(%arg0: i32, %arg1: i32, %arg2: memref<4xi32, #tpu.memory_space<smem>>) -> (i32, i32, i32) {
    %c0_i32 = arith.constant 0 : i32
    %c0_i32_0 = arith.constant 0 : i32
    %c0_i32_1 = arith.constant 0 : i32
    return %arg0, %c0_i32, %c0_i32_0 : i32, i32, i32
  }
}

</mosaic_0001>

<llo_original>
// kernel: tpu_custom_call.1
$region0: #{tpu_custom_call.1}
  #allocation0 [shape = 'u32[]', space=smem, size = 0x4, offset = 0x4, fixed_abs, tag = 'smem constant byte address 0x4 - core index']
  #allocation1 [shape = 'u32[72,128]{1,0:T(1,128)}', space=vmem, size = 0x9000, scoped, tag = 'internal scratch']
  #allocation2 [shape = 'f32[1,1]{1,0:T(1,128)}', space=vmem, size = 0x200, scoped, tag = 'scratch operand']
  #allocation3 [shape = 'f32[1,1]{1,0:T(1,128)}', space=vmem, size = 0x200, scoped, tag = 'scratch operand']
  #allocation4 [shape = 'f32[1,8]{1,0:T(1,128)}', space=vmem, size = 0x200, scoped, tag = 'scratch operand']
  #allocation5 [shape = 's32[1]{0}', space=sflag, size = 0x4, scoped, tag = 'scoped memory for tpu_custom_call.1']
  #allocation6 [shape = 'u8[512]{0}', space=smem, size = 0x200, scoped, tag = 'prefetched SMEM operand 0']
  %s0 = inlined_call_operand.hbm [shape: s32[4], index: 0, kind: input, shape index: {}]
  %s1 = inlined_call_operand.hbm [shape: bf16[1,32], index: 1, kind: input, shape index: {}]
  %s2 = inlined_call_operand.hbm [shape: bf16[32,512], index: 2, kind: input, shape index: {}]
  %s3 = inlined_call_operand.hbm [shape: bf16[1,512], index: 3, kind: input, shape index: {}]
  %s4 = inlined_call_operand.vmem [shape: s32[1,8], index: 4, kind: input, shape index: {}]
  %s5 = inlined_call_operand.vmem [shape: f32[2,1,1], index: 5, kind: output, shape index: {0}]
  %s6 = inlined_call_operand.vmem [shape: f32[2,1,1], index: 6, kind: output, shape index: {1}]
  %s7 = inlined_call_operand.hbm [shape: f32[2,1,8], index: 7, kind: output, shape index: {2}]
  %8 = xla_tuple %s5, %s6, %s7
  %s9 = sld [smem:[#allocation0]]
  $region89: #{tpu_custom_call.1} parent=0
    _
  %s11 = ssub.s32 1, %s9
  %s12 = scalar_select 0, %s11, %s9
  %s14 = sshll.u32 %s0, 4
  %s15 = int_to_ptr.hbm [resolvable:$true] %s14
  %17 = dma.hbm_to_smem %s15, 16, [#allocation6], [#allocation5]
  %19 = dma.done [#allocation5], 16
  %20 = sfence
  $region1: #{tpu_custom_call.1} parent=0
    #allocation7 [shape = 'u8[512]{0}', space=vmem, size = 0x400, scoped, tag = 'input window, operand 1, single buffered']
    #allocation8 [shape = 's32[2]{0}', space=sflag, size = 0x8, scoped, tag = 'scoped memory for tpu_custom_call.1']
    #allocation9 [shape = 's32[2]{0}', space=sflag, size = 0x8, scoped, tag = 'scoped memory for tpu_custom_call.1']
    #allocation10 [shape = 'u8[16384]{0}', space=vmem, size = 0x4000, scoped, tag = 'input window, operand 2']
    #allocation11 [shape = 's32[2]{0}', space=sflag, size = 0x8, scoped, tag = 'scoped memory for tpu_custom_call.1']
    #allocation12 [shape = 'u8[1024]{0}', space=vmem, size = 0x400, scoped, tag = 'input window, operand 3']
    #allocation13 [shape = 'u8[1024]{0}', space=vmem, size = 0x400, scoped, tag = 'output window, operand 2']
    %21 = vsyncpa [#allocation8], 0
    %22 = vsyncpa [#allocation11], 0
    %s23 = scalar_lea.sflag [#allocation11], 1
    %24 = vsyncpa %s23, 0
    %25 = vsyncpa [#allocation9], 0
    %s26 = scalar_lea.sflag [#allocation9], 1
    %27 = vsyncpa %s26, 0
    loop: start=0, step=1, limit=6
    $region2: #{tpu_custom_call.1} parent=1 // loop_pre_header
      _
    $region3: #{tpu_custom_call.1} parent=1 // loop_header
      %s29 = sphi 0, %s33
      %p30 = scmp.ge.s32.totalorder %s29, 6
      %s36 = sphi 0, %s48
      %s37 = sphi 0, %s44
      %s38 = sphi 0, %s36
      %s39 = sphi 0, %s37
      %s40 = sphi 0, %s38
      %s41 = sphi 0, %s39
      %s49 = sphi 0, %s49
      %s51 = sphi 0, %s49
      %s52 = sphi 0, %s51
      %s66 = sphi 0, %s52
      %s76 = sphi 0, %s78
      %s79 = sphi 0, %s76
      %s80 = sphi 0, %s79
      %s96 = sphi 0, %s80
      %s106 = sphi 0, %s108
      %s109 = sphi 0, %s106
      %s110 = sphi 0, %s109
      %s126 = sphi 0, %s110
      %s130 = sphi 0, %s130
      %s132 = sphi 0, %s130
      %s133 = sphi 0, %s132
      %s147 = sphi 0, %s133
      %s153 = sphi 0, %s155
      %s156 = sphi 0, %s153
      %s157 = sphi 0, %s156
      %s173 = sphi 0, %s157
      %s179 = sphi 0, %s181
      %s182 = sphi 0, %s179
      %s183 = sphi 0, %s182
      %s199 = sphi 0, %s183
      %s205 = sphi 0, %s207
      %s208 = sphi 0, %s205
      %s209 = sphi 0, %s208
      %s225 = sphi 0, %s209
    $region4: #{tpu_custom_call.1} parent=1 // loop_header_branch
      %32 = sbr.rel (%p30) target = $region8
    $region5: #{tpu_custom_call.1} parent=1 // loop_body
      %s34 = ssub.s32 %s29, 1
      %s35 = ssub.s32 %s29, 2
      %s42 = sadd.s32 1, %s37
      %p43 = scmp.ge.s32.totalorder %s42, 2
      %s44 = scalar_select %p43, 0, %s42
      %s45 = sadd.s32 1, %s36
      %s46 = scalar_select %p43, %s45, %s36
      %p47 = scmp.ge.s32.totalorder %s46, 2
      %s48 = scalar_select %p47, 0, %s46
      %s50 = sadd.s32 %s49, 1
      %p53 = scmp.eq.s32.totalorder %s29, 3
      %p54 = scmp.ne.s32.totalorder %s49, %s51
      %p55 = scmp.eq.s32.totalorder %s29, 0
      %p56 = por %p54, %p55
      %p57 = scmp.ne.s32.totalorder %s49, %s51
      %p58 = scmp.eq.s32.totalorder %s34, 3
      %p59 = por %p57, %p58
      %p60 = scmp.ne.s32.totalorder %s51, %s52
      %p61 = scmp.eq.s32.totalorder %s34, 0
      %p62 = por %p60, %p61
      %p63 = scmp.ne.s32.totalorder %s51, %s52
      %p64 = scmp.eq.s32.totalorder %s35, 3
      %p65 = por %p63, %p64
      %p67 = scmp.ne.s32.totalorder %s52, %s66
      %p68 = scmp.eq.s32.totalorder %s35, 0
      %p69 = por %p67, %p68
      %s70 = smul.u32 %s36, 2
      %s71 = sadd.s32 %s70, %s37
      %s72 = smul.u32 %s48, 2
      %s73 = sadd.s32 %s72, %s44
      %s74 = ssub.s32 %s71, %s73
      %p75 = scmp.eq.s32.totalorder %s74, 0
      %s77 = sadd.s32 %s76, 1
      %s78 = scalar_select %p75, %s76, %s77
      %p81 = pneg %p75
      %p82 = scmp.eq.s32.totalorder %s29, 3
      %p83 = por %p81, %p82
      %p84 = scmp.ne.s32.totalorder %s76, %s79
      %p85 = scmp.eq.s32.totalorder %s29, 0
      %p86 = por %p84, %p85
      %p87 = scmp.ne.s32.totalorder %s76, %s79
      %p88 = scmp.eq.s32.totalorder %s34, 3
      %p89 = por %p87, %p88
      %p90 = scmp.ne.s32.totalorder %s79, %s80
      %p91 = scmp.eq.s32.totalorder %s34, 0
      %p92 = por %p90, %p91
      %p93 = scmp.ne.s32.totalorder %s79, %s80
      %p94 = scmp.eq.s32.totalorder %s35, 3
      %p95 = por %p93, %p94
      %p97 = scmp.ne.s32.totalorder %s80, %s96
      %p98 = scmp.eq.s32.totalorder %s35, 0
      %p99 = por %p97, %p98
      %s100 = smul.u32 %s36, 2
      %s101 = sadd.s32 %s100, %s37
      %s102 = smul.u32 %s48, 2
      %s103 = sadd.s32 %s102, %s44
      %s104 = ssub.s32 %s101, %s103
      %p105 = scmp.eq.s32.totalorder %s104, 0
      %s107 = sadd.s32 %s106, 1
      %s108 = scalar_select %p105, %s106, %s107
      %p111 = pneg %p105
      %p112 = scmp.eq.s32.totalorder %s29, 3
      %p113 = por %p111, %p112
      %p114 = scmp.ne.s32.totalorder %s106, %s109
      %p115 = scmp.eq.s32.totalorder %s29, 0
      %p116 = por %p114, %p115
      %p117 = scmp.ne.s32.totalorder %s106, %s109
      %p118 = scmp.eq.s32.totalorder %s34, 3
      %p119 = por %p117, %p118
      %p120 = scmp.ne.s32.totalorder %s109, %s110
      %p121 = scmp.eq.s32.totalorder %s34, 0
      %p122 = por %p120, %p121
      %p123 = scmp.ne.s32.totalorder %s109, %s110
      %p124 = scmp.eq.s32.totalorder %s35, 3
      %p125 = por %p123, %p124
      %p127 = scmp.ne.s32.totalorder %s110, %s126
      %p128 = scmp.eq.s32.totalorder %s35, 0
      %p129 = por %p127, %p128
      %s131 = sadd.s32 %s130, 1
      %p134 = scmp.eq.s32.totalorder %s29, 3
      %p135 = scmp.ne.s32.totalorder %s130, %s132
      %p136 = scmp.eq.s32.totalorder %s29, 0
      %p137 = por %p135, %p136
      %p138 = scmp.ne.s32.totalorder %s130, %s132
      %p139 = scmp.eq.s32.totalorder %s34, 3
      %p140 = por %p138, %p139
      %p141 = scmp.ne.s32.totalorder %s132, %s133
      %p142 = scmp.eq.s32.totalorder %s34, 0
      %p143 = por %p141, %p142
      %p144 = scmp.ne.s32.totalorder %s132, %s133
      %p145 = scmp.eq.s32.totalorder %s35, 3
      %p146 = por %p144, %p145
      %p148 = scmp.ne.s32.totalorder %s133, %s147
      %p149 = scmp.eq.s32.totalorder %s35, 0
      %p150 = por %p148, %p149
      %s151 = ssub.s32 %s36, %s48
      %p152 = scmp.eq.s32.totalorder %s151, 0
      %s154 = sadd.s32 %s153, 1
      %s155 = scalar_select %p152, %s153, %s154
      %p158 = pneg %p152
      %p159 = scmp.eq.s32.totalorder %s29, 3
      %p160 = por %p158, %p159
      %p161 = scmp.ne.s32.totalorder %s153, %s156
      %p162 = scmp.eq.s32.totalorder %s29, 0
      %p163 = por %p161, %p162
      %p164 = scmp.ne.s32.totalorder %s153, %s156
      %p165 = scmp.eq.s32.totalorder %s34, 3
      %p166 = por %p164, %p165
      %p167 = scmp.ne.s32.totalorder %s156, %s157
      %p168 = scmp.eq.s32.totalorder %s34, 0
      %p169 = por %p167, %p168
      %p170 = scmp.ne.s32.totalorder %s156, %s157
      %p171 = scmp.eq.s32.totalorder %s35, 3
      %p172 = por %p170, %p171
      %p174 = scmp.ne.s32.totalorder %s157, %s173
      %p175 = scmp.eq.s32.totalorder %s35, 0
      %p176 = por %p174, %p175
      %s177 = ssub.s32 %s36, %s48
      %p178 = scmp.eq.s32.totalorder %s177, 0
      %s180 = sadd.s32 %s179, 1
      %s181 = scalar_select %p178, %s179, %s180
      %p184 = pneg %p178
      %p185 = scmp.eq.s32.totalorder %s29, 3
      %p186 = por %p184, %p185
      %p187 = scmp.ne.s32.totalorder %s179, %s182
      %p188 = scmp.eq.s32.totalorder %s29, 0
      %p189 = por %p187, %p188
      %p190 = scmp.ne.s32.totalorder %s179, %s182
      %p191 = scmp.eq.s32.totalorder %s34, 3
      %p192 = por %p190, %p191
      %p193 = scmp.ne.s32.totalorder %s182, %s183
      %p194 = scmp.eq.s32.totalorder %s34, 0
      %p195 = por %p193, %p194
      %p196 = scmp.ne.s32.totalorder %s182, %s183
      %p197 = scmp.eq.s32.totalorder %s35, 3
      %p198 = por %p196, %p197
      %p200 = scmp.ne.s32.totalorder %s183, %s199
      %p201 = scmp.eq.s32.totalorder %s35, 0
      %p202 = por %p200, %p201
      %s203 = ssub.s32 %s36, %s48
      %p204 = scmp.eq.s32.totalorder %s203, 0
      %s206 = sadd.s32 %s205, 1
      %s207 = scalar_select %p204, %s205, %s206
      %p210 = pneg %p204
      %p211 = scmp.eq.s32.totalorder %s29, 3
      %p212 = por %p210, %p211
      %p213 = scmp.ne.s32.totalorder %s205, %s208
      %p214 = scmp.eq.s32.totalorder %s29, 0
      %p215 = por %p213, %p214
      %p216 = scmp.ne.s32.totalorder %s205, %s208
      %p217 = scmp.eq.s32.totalorder %s34, 3
      %p218 = por %p216, %p217
      %p219 = scmp.ne.s32.totalorder %s208, %s209
      %p220 = scmp.eq.s32.totalorder %s34, 0
      %p221 = por %p219, %p220
      %p222 = scmp.ne.s32.totalorder %s208, %s209
      %p223 = scmp.eq.s32.totalorder %s35, 3
      %p224 = por %p222, %p223
      %p226 = scmp.ne.s32.totalorder %s209, %s225
      %p227 = scmp.eq.s32.totalorder %s35, 0
      %p228 = por %p226, %p227
      %p229 = scmp.le.s32.totalorder 1, %s29
      %p230 = scmp.lt.s32.totalorder %s29, 5
      %p231 = pnand %p229, %p230
      %p232 = pneg %p231
      // Predicated region
      $region9: #{tpu_custom_call.1} parent=5 // pred_check
        _
      $region10: #{tpu_custom_call.1} parent=5 // pred_check_branch
        %234 = sbr.rel (%p231) target = $region12
      $region11: #{tpu_custom_call.1} parent=5 // pred_region
        %s235 = ssub.s32 %s29, 1
        // Predicated region
        $region13: #{tpu_custom_call.1} parent=11 // pred_check
          %p236 = pneg %p62
        $region14: #{tpu_custom_call.1} parent=11 // pred_check_branch
          %238 = sbr.rel (%p236) target = $region16
        $region15: #{tpu_custom_call.1} parent=11 // pred_region
          %240 = vsyncadd [#allocation8], 0
          %s242 = sshll.u32 %s1, 4
          %s243 = int_to_ptr.hbm [resolvable:$true] %s242
          %s244 = sshll.u32 [#allocation7], 4
          %s245 = int_to_ptr.vmem [resolvable:$true] %s244
          %247 = dma.hbm_to_vmem [thread:$0]  %s243, 16, %s245, [#allocation8]
        $region16: #{tpu_custom_call.1} parent=11 // pred_fallthru
          _
        // Predicated region
        $region17: #{tpu_custom_call.1} parent=11 // pred_check
          %p248 = pneg %p143
        $region18: #{tpu_custom_call.1} parent=11 // pred_check_branch
          %250 = sbr.rel (%p248) target = $region20
        $region19: #{tpu_custom_call.1} parent=11 // pred_region
          _
        $region20: #{tpu_custom_call.1} parent=11 // pred_fallthru
          _
      $region12: #{tpu_custom_call.1} parent=5 // pred_fallthru
        _
      %p251 = scmp.lt.s32.totalorder %s29, 4
      // Predicated region
      $region21: #{tpu_custom_call.1} parent=5 // pred_check
        %p252 = pneg %p251
      $region22: #{tpu_custom_call.1} parent=5 // pred_check_branch
        %254 = sbr.rel (%p252) target = $region24
      $region23: #{tpu_custom_call.1} parent=5 // pred_region
        // Predicated region
        $region25: #{tpu_custom_call.1} parent=23 // pred_check
          %p255 = pneg %p86
        $region26: #{tpu_custom_call.1} parent=23 // pred_check_branch
          %257 = sbr.rel (%p255) target = $region28
        $region27: #{tpu_custom_call.1} parent=23 // pred_region
          %s258 = sand.u32 %s29, 1
          %s259 = scalar_lea.sflag [#allocation11], %s258
          %s260 = sand.u32 %s76, 1
          %s261 = smul.addr %s260, 16
          %s262 = scalar_lea.vmem [#allocation10], %s261
          %s263 = smul.u32 %s36, 2
          %s264 = sadd.s32 %s263, %s37
          %266 = vsyncadd %s259, 0
          %s267 = smul.addr %s264, 4
          %s268 = scalar_lea.hbm %s2, %s267
          %s269 = sshll.u32 %s268, 4
          %s270 = int_to_ptr.hbm [resolvable:$true] %s269
          %s271 = sshll.u32 %s262, 4
          %s272 = int_to_ptr.vmem [resolvable:$true] %s271
          %277 = dma.hbm_to_vmem [thread:$0]  %s270, 256, %s272, %s259, 256, 64, 4
        $region28: #{tpu_custom_call.1} parent=23 // pred_fallthru
          _
        // Predicated region
        $region29: #{tpu_custom_call.1} parent=23 // pred_check
          %p278 = pneg %p116
        $region30: #{tpu_custom_call.1} parent=23 // pred_check_branch
          %280 = sbr.rel (%p278) target = $region32
        $region31: #{tpu_custom_call.1} parent=23 // pred_region
          %s281 = sand.u32 %s29, 1
          %s282 = scalar_lea.sflag [#allocation11], %s281
          %s283 = sand.u32 %s106, 1
          %s284 = scalar_lea.vmem [#allocation12], %s283
          %s285 = smul.u32 %s36, 2
          %s286 = sadd.s32 %s285, %s37
          %288 = vsyncadd %s282, 0
          %s289 = scalar_lea.hbm %s3, %s286
          %s291 = sshll.u32 %s289, 4
          %s292 = int_to_ptr.hbm [resolvable:$true] %s291
          %s293 = sshll.u32 %s284, 4
          %s294 = int_to_ptr.vmem [resolvable:$true] %s293
          %296 = dma.hbm_to_vmem [thread:$0]  %s292, 16, %s294, %s282
        $region32: #{tpu_custom_call.1} parent=23 // pred_fallthru
          _
      $region24: #{tpu_custom_call.1} parent=5 // pred_fallthru
        _
      %p297 = scmp.le.s32.totalorder 1, %s29
      %p298 = scmp.lt.s32.totalorder %s29, 5
      %p299 = pnand %p297, %p298
      %p300 = pneg %p299
      // Predicated region
      $region33: #{tpu_custom_call.1} parent=5 // pred_check
        _
      $region34: #{tpu_custom_call.1} parent=5 // pred_check_branch
        %302 = sbr.rel (%p299) target = $region36
      $region35: #{tpu_custom_call.1} parent=5 // pred_region
        %s303 = ssub.s32 %s29, 1
        // Predicated region
        $region37: #{tpu_custom_call.1} parent=35 // pred_check
          %p304 = pneg %p62
        $region38: #{tpu_custom_call.1} parent=35 // pred_check_branch
          %306 = sbr.rel (%p304) target = $region40
        $region39: #{tpu_custom_call.1} parent=35 // pred_region
          %308 = dma.done [#allocation8], 16
        $region40: #{tpu_custom_call.1} parent=35 // pred_fallthru
          _
        %s309 = sand.u32 %s34, 1
        %s310 = scalar_lea.sflag [#allocation11], %s309
        %s311 = sand.u32 %s79, 1
        %s312 = smul.addr %s311, 16
        %s313 = scalar_lea.vmem [#allocation10], %s312
        // Predicated region
        $region41: #{tpu_custom_call.1} parent=35 // pred_check
          %p314 = pneg %p92
        $region42: #{tpu_custom_call.1} parent=35 // pred_check_branch
          %316 = sbr.rel (%p314) target = $region44
        $region43: #{tpu_custom_call.1} parent=35 // pred_region
          %318 = dma.done %s310, 256
        $region44: #{tpu_custom_call.1} parent=35 // pred_fallthru
          _
        %s319 = sand.u32 %s34, 1
        %s320 = scalar_lea.sflag [#allocation11], %s319
        %s321 = sand.u32 %s109, 1
        %s322 = scalar_lea.vmem [#allocation12], %s321
        // Predicated region
        $region45: #{tpu_custom_call.1} parent=35 // pred_check
          %p323 = pneg %p122
        $region46: #{tpu_custom_call.1} parent=35 // pred_check_branch
          %325 = sbr.rel (%p323) target = $region48
        $region47: #{tpu_custom_call.1} parent=35 // pred_region
          %327 = dma.done %s320, 16
        $region48: #{tpu_custom_call.1} parent=35 // pred_fallthru
          _
        %p328 = pneg %p62
        %p329 = pneg %p59
        %s330 = sand.u32 %s34, 1
        %s331 = scalar_lea.sflag [#allocation11], %s330
        %s332 = sand.u32 %s79, 1
        %s333 = smul.addr %s332, 16
        %s334 = scalar_lea.vmem [#allocation10], %s333
        %p335 = pneg %p92
        %p336 = pneg %p89
        %s337 = sand.u32 %s34, 1
        %s338 = scalar_lea.sflag [#allocation11], %s337
        %s339 = sand.u32 %s109, 1
        %s340 = scalar_lea.vmem [#allocation12], %s339
        %p341 = pneg %p122
        %p342 = pneg %p119
        %p343 = pneg %p143
        %p344 = pneg %p140
        %p345 = pneg %p169
        %p346 = pneg %p166
        %p347 = scmp.lt.s32.totalorder %s38, 1
        %s348 = scalar_select %p347, %s38, 1
        %s349 = scalar_lea.vmem %s5, %s348
        %p350 = pneg %p195
        %p351 = pneg %p192
        %p352 = scmp.lt.s32.totalorder %s38, 1
        %s353 = scalar_select %p352, %s38, 1
        %s354 = scalar_lea.vmem %s6, %s353
        %p355 = pneg %p221
        %p356 = pneg %p218
        %s357 = sand.u32 %s208, 1
        %s358 = scalar_lea.sflag [#allocation9], %s357
        %s359 = sand.u32 %s208, 1
        %s360 = scalar_lea.vmem [#allocation13], %s359
        %s361 = smul.u32 %s38, 2
        %s362 = sadd.s32 %s361, %s39
        %s363 = smul.u32 %s38, 2
        %s364 = sadd.s32 %s363, %s39
        %p365 = scmp.lt.s32.totalorder %s38, 1
        %s366 = scalar_select %p365, %s38, 1
        %s367 = scalar_lea.vmem %s5, %s366
        %p368 = scmp.lt.s32.totalorder %s38, 1
        %s369 = scalar_select %p368, %s38, 1
        %s370 = scalar_lea.vmem %s6, %s369
        %p372 = scmp.eq.s32.totalorder %s39, 0
        // Predicated region
        $region49: #{tpu_custom_call.1} parent=35 // pred_check
          %p373 = pneg %p372
        $region50: #{tpu_custom_call.1} parent=35 // pred_check_branch
          %375 = sbr.rel (%p373) target = $region52
        $region51: #{tpu_custom_call.1} parent=35 // pred_region
          %vm376 = vcmask 0
          %377 = vst.msk [vmem:[#allocation2] sm:$0x1] %vm376, -3e+38
          %378 = vst.msk [vmem:[#allocation3] sm:$0x1] %vm376, 0.0
          %vm379 = vcmask 57344
          %380 = vst.msk [vmem:[#allocation4] sm:$0x1] %vm379, 0.0
        $region52: #{tpu_custom_call.1} parent=35 // pred_fallthru
          _
        %v381 = vld [vmem:[#allocation7] sm:$0x1]
        %v382 = vld [vmem:[%s313] sm:$0xf]
        %v383 = vld [vmem:[%s313 + $0x4] sm:$0xf]
        %v384 = vld [vmem:[%s313 + $0x8] sm:$0xf]
        %v385 = vld [vmem:[%s313 + $0xc] sm:$0xf]
        %v386 = vld [vmem:[%s322] sm:$0x1]
        %v387 = vunpack.c.l.bf16 %v386
        %v392 = vunpack.c.l.b16 %v382
        %v393 = vunpack.c.l.b16 %v383
        %v394 = vunpack.c.l.b16 %v384
        %v395 = vunpack.c.l.b16 %v385
        %v396 = vpack.c.b16 %v393, %v392
        %v397 = vpack.c.b16 %v395, %v394
        %vm400 = vcmask 261120
        %v402 = vsel %vm400, %v381, 0
        %404 = vmatpush.bf16.msra.mxu0 0
        %405 = vmatpush.bf16.msra.mxu0 0
        %406 = vmatpush.bf16.msra.mxu0 0
        %407 = vmatpush.bf16.msra.mxu0 0
        %408 = vmatpush.bf16.msra.mxu0 0
        %409 = vmatpush.bf16.msra.mxu0 0
        %410 = vmatpush.bf16.msra.mxu0 %v397
        %411 = vmatpush.bf16.msra.mxu0 %v396
        %412 = vmatmul.bf16.gmra.mxu0 %v402
        %v413 = vpop.f32.mrf.mxu0
        %v414 = vadd.f32 %v387, %v413
        %v415 = vpop.f32.mrf.mxu0
        %416 = vdwg.mxu0
        %v417 = vld [vmem:[#allocation2] sm:$0x1]
        %vm418 = vcmask 1040384
        %v419 = vsel %vm418, %v414, -inf
        %420 = vmax.xlane.f32.xlu0 %v419
        %v421 = vpop.xlane.xlu0 %420
        %v422 = vmax.f32 %v417, %v421
        %v423 = vld [vmem:[#allocation3] sm:$0x1]
        %v424 = vsub.f32 %v417, %v422
        %v425 = vmul.f32 %v424, 1.442695
        %v426 = vpow.pop %v425
        %v427 = vmul.f32 %v423, %v426
        %429 = vset.pattern.permute.xlu0 0
        %430 = vperm.xlu0 %429, %v422
        %v431 = vpop.permute.xlu0 %430
        %v433 = vperm.slane %v431, 0
        %v434 = vsub.f32 %v414, %v433
        %v435 = vmul.f32 %v434, 1.442695
        %v436 = vpow.pop %v435
        %v437 = vsel %vm418, %v436, 0.0
        %438 = vadd.xlane.f32.xlu0 %v437
        %v439 = vpop.xlane.xlu0 %438
        %v440 = vadd.f32 %v427, %v439
        %vm441 = vcmask 0
        %442 = vst.msk [vmem:[#allocation3] sm:$0x1] %vm441, %v440
        %443 = vst.msk [vmem:[#allocation2] sm:$0x1] %vm441, %v422
        %s444 = smul.u32 %s38, 2
        %s445 = sadd.s32 %s444, %s39
        %s446 = sld [smem:[#allocation6 + %s445]]
        %p447 = scmp.ne.s32.totalorder %s446, 0
        // Predicated region
        $region53: #{tpu_custom_call.1} parent=35 // pred_check
          %p448 = pneg %p447
        $region54: #{tpu_custom_call.1} parent=35 // pred_check_branch
          %450 = sbr.rel (%p448) target = $region56
        $region55: #{tpu_custom_call.1} parent=35 // pred_region
          %s451 = smul.u32 %s445, 128
          %v452 = vlaneseq
          %v453 = vand.u32 %v452, 127
          %v454 = vld [vmem:[%s4] sm:$0x1]
          %v455 = vstv %s451
          %v456 = vsub.s32 %v454, %v455
          %457 = vset.pattern.permute.xlu0 0
          %458 = vperm.xlu0 %457, %v456
          %v459 = vpop.permute.xlu0 %458
          %v460 = vperm.slane %v459, 0
          %vm461 = vcmp.eq.s32.totalorder %v453, %v460
          %v462 = vsel %vm461, %v414, 0.0
          %v463 = vsel %vm418, %v462, 0.0
          %464 = vadd.xlane.f32.xlu0 %v463
          %v465 = vpop.xlane.xlu0 %464
          %466 = vset.pattern.permute.xlu0 1
          %467 = vperm.xlu0 %466, %v456
          %v468 = vpop.permute.xlu0 %467
          %v469 = vperm.slane %v468, 0
          %vm470 = vcmp.eq.s32.totalorder %v453, %v469
          %v471 = vsel %vm470, %v414, 0.0
          %v472 = vsel %vm418, %v471, 0.0
          %473 = vadd.xlane.f32.xlu0 %v472
          %v474 = vpop.xlane.xlu0 %473
          %475 = vset.pattern.permute.xlu0 2
          %476 = vperm.xlu0 %475, %v456
          %v477 = vpop.permute.xlu0 %476
          %v478 = vperm.slane %v477, 0
          %vm479 = vcmp.eq.s32.totalorder %v453, %v478
          %v480 = vsel %vm479, %v414, 0.0
          %v481 = vsel %vm418, %v480, 0.0
          %482 = vadd.xlane.f32.xlu0 %v481
          %v483 = vpop.xlane.xlu0 %482
          %484 = vset.pattern.permute.xlu0 3
          %485 = vperm.xlu0 %484, %v456
          %v486 = vpop.permute.xlu0 %485
          %v487 = vperm.slane %v486, 0
          %vm488 = vcmp.eq.s32.totalorder %v453, %v487
          %v489 = vsel %vm488, %v414, 0.0
          %v490 = vsel %vm418, %v489, 0.0
          %491 = vadd.xlane.f32.xlu0 %v490
          %v492 = vpop.xlane.xlu0 %491
          %493 = vset.pattern.permute.xlu0 4
          %494 = vperm.xlu0 %493, %v456
          %v495 = vpop.permute.xlu0 %494
          %v496 = vperm.slane %v495, 0
          %vm497 = vcmp.eq.s32.totalorder %v453, %v496
          %v498 = vsel %vm497, %v414, 0.0
          %v499 = vsel %vm418, %v498, 0.0
          %500 = vadd.xlane.f32.xlu0 %v499
          %v501 = vpop.xlane.xlu0 %500
          %502 = vset.pattern.permute.xlu0 5
          %503 = vperm.xlu0 %502, %v456
          %v504 = vpop.permute.xlu0 %503
          %v505 = vperm.slane %v504, 0
          %vm506 = vcmp.eq.s32.totalorder %v453, %v505
          %v507 = vsel %vm506, %v414, 0.0
          %v508 = vsel %vm418, %v507, 0.0
          %509 = vadd.xlane.f32.xlu0 %v508
          %v510 = vpop.xlane.xlu0 %509
          %511 = vset.pattern.permute.xlu0 6
          %512 = vperm.xlu0 %511, %v456
          %v513 = vpop.permute.xlu0 %512
          %v514 = vperm.slane %v513, 0
          %vm515 = vcmp.eq.s32.totalorder %v453, %v514
          %v516 = vsel %vm515, %v414, 0.0
          %v517 = vsel %vm418, %v516, 0.0
          %518 = vadd.xlane.f32.xlu0 %v517
          %v519 = vpop.xlane.xlu0 %518
          %520 = vset.pattern.permute.xlu0 7
          %521 = vperm.xlu0 %520, %v456
          %v522 = vpop.permute.xlu0 %521
          %v523 = vperm.slane %v522, 0
          %vm524 = vcmp.eq.s32.totalorder %v453, %v523
          %v525 = vsel %vm524, %v414, 0.0
          %v526 = vsel %vm418, %v525, 0.0
          %527 = vadd.xlane.f32.xlu0 %v526
          %v528 = vpop.xlane.xlu0 %527
          %v529 = vld [vmem:[#allocation4] sm:$0x1]
          %vm530 = vcmask 7168
          %v531 = vsel %vm530, %v465, %v474
          %vm532 = vcmask 15360
          %v533 = vsel %vm532, %v531, %v483
          %vm534 = vcmask 23552
          %v535 = vsel %vm534, %v533, %v492
          %vm536 = vcmask 31744
          %v537 = vsel %vm536, %v535, %v501
          %vm538 = vcmask 39936
          %v539 = vsel %vm538, %v537, %v510
          %vm540 = vcmask 48128
          %v541 = vsel %vm540, %v539, %v519
          %vm542 = vcmask 56320
          %v543 = vsel %vm542, %v541, %v528
          %v544 = vadd.f32 %v529, %v543
          %vm545 = vcmask 57344
          %546 = vst.msk [vmem:[#allocation4] sm:$0x1] %vm545, %v544
        $region56: #{tpu_custom_call.1} parent=35 // pred_fallthru
          _
        %p547 = scmp.eq.s32.totalorder %s39, 1
        // Predicated region
        $region57: #{tpu_custom_call.1} parent=35 // pred_check
          %p548 = pneg %p547
        $region58: #{tpu_custom_call.1} parent=35 // pred_check_branch
          %550 = sbr.rel (%p548) target = $region60
        $region59: #{tpu_custom_call.1} parent=35 // pred_region
          %v551 = vld [vmem:[#allocation2] sm:$0x1]
          %552 = vst.msk [vmem:[%s367] sm:$0x1] %vm441, %v551
          %v553 = vld [vmem:[#allocation3] sm:$0x1]
          %554 = vst.msk [vmem:[%s370] sm:$0x1] %vm441, %v553
          %v555 = vld [vmem:[#allocation4] sm:$0x1]
          %vm556 = vcmask 57344
          %557 = vst.msk [vmem:[%s360] sm:$0x1] %vm556, %v555
        $region60: #{tpu_custom_call.1} parent=35 // pred_fallthru
          _
        %p558 = scmp.lt.s32.totalorder %s38, 1
        %s559 = scalar_select %p558, %s38, 1
        %s560 = scalar_lea.vmem %s5, %s559
        %p561 = scmp.lt.s32.totalorder %s38, 1
        %s562 = scalar_select %p561, %s38, 1
        %s563 = scalar_lea.vmem %s6, %s562
        %s564 = sand.u32 %s208, 1
        %s565 = scalar_lea.sflag [#allocation9], %s564
        %s566 = sand.u32 %s208, 1
        %s567 = scalar_lea.vmem [#allocation13], %s566
        // Predicated region
        $region61: #{tpu_custom_call.1} parent=35 // pred_check
          %p568 = pneg %p166
        $region62: #{tpu_custom_call.1} parent=35 // pred_check_branch
          %570 = sbr.rel (%p568) target = $region64
        $region63: #{tpu_custom_call.1} parent=35 // pred_region
          _
        $region64: #{tpu_custom_call.1} parent=35 // pred_fallthru
          _
        // Predicated region
        $region65: #{tpu_custom_call.1} parent=35 // pred_check
          %p571 = pneg %p192
        $region66: #{tpu_custom_call.1} parent=35 // pred_check_branch
          %573 = sbr.rel (%p571) target = $region68
        $region67: #{tpu_custom_call.1} parent=35 // pred_region
          _
        $region68: #{tpu_custom_call.1} parent=35 // pred_fallthru
          _
        // Predicated region
        $region69: #{tpu_custom_call.1} parent=35 // pred_check
          %p574 = pneg %p218
        $region70: #{tpu_custom_call.1} parent=35 // pred_check_branch
          %576 = sbr.rel (%p574) target = $region72
        $region71: #{tpu_custom_call.1} parent=35 // pred_region
          %578 = vsyncadd %s565, 0
          %s579 = scalar_lea.hbm %s7, %s38
          %s581 = sshll.u32 %s567, 4
          %s582 = int_to_ptr.vmem [resolvable:$true] %s581
          %s583 = sshll.u32 %s579, 4
          %s584 = int_to_ptr.hbm [resolvable:$true] %s583
          %586 = dma.vmem_to_hbm [thread:$0]  %s582, 16, %s584, %s565
        $region72: #{tpu_custom_call.1} parent=35 // pred_fallthru
          _
      $region36: #{tpu_custom_call.1} parent=5 // pred_fallthru
        _
      %p587 = scmp.le.s32.totalorder 2, %s29
      // Predicated region
      $region73: #{tpu_custom_call.1} parent=5 // pred_check
        %p588 = pneg %p587
      $region74: #{tpu_custom_call.1} parent=5 // pred_check_branch
        %590 = sbr.rel (%p588) target = $region76
      $region75: #{tpu_custom_call.1} parent=5 // pred_region
        %s591 = ssub.s32 %s29, 2
        // Predicated region
        $region77: #{tpu_custom_call.1} parent=75 // pred_check
          %p592 = pneg %p172
        $region78: #{tpu_custom_call.1} parent=75 // pred_check_branch
          %594 = sbr.rel (%p592) target = $region80
        $region79: #{tpu_custom_call.1} parent=75 // pred_region
          %p595 = scmp.lt.s32.totalorder %s40, 1
          %s596 = scalar_select %p595, %s40, 1
          %s597 = scalar_lea.vmem %s5, %s596
        $region80: #{tpu_custom_call.1} parent=75 // pred_fallthru
          _
        // Predicated region
        $region81: #{tpu_custom_call.1} parent=75 // pred_check
          %p598 = pneg %p198
        $region82: #{tpu_custom_call.1} parent=75 // pred_check_branch
          %600 = sbr.rel (%p598) target = $region84
        $region83: #{tpu_custom_call.1} parent=75 // pred_region
          %p601 = scmp.lt.s32.totalorder %s40, 1
          %s602 = scalar_select %p601, %s40, 1
          %s603 = scalar_lea.vmem %s6, %s602
        $region84: #{tpu_custom_call.1} parent=75 // pred_fallthru
          _
        // Predicated region
        $region85: #{tpu_custom_call.1} parent=75 // pred_check
          %p604 = pneg %p224
        $region86: #{tpu_custom_call.1} parent=75 // pred_check_branch
          %606 = sbr.rel (%p604) target = $region88
        $region87: #{tpu_custom_call.1} parent=75 // pred_region
          %s607 = sand.u32 %s209, 1
          %s608 = scalar_lea.sflag [#allocation9], %s607
          %s609 = sand.u32 %s209, 1
          %s610 = scalar_lea.vmem [#allocation13], %s609
          %612 = dma.done %s608, 16
        $region88: #{tpu_custom_call.1} parent=75 // pred_fallthru
          _
      $region76: #{tpu_custom_call.1} parent=5 // pred_fallthru
        _
    $region6: #{tpu_custom_call.1} parent=1 // loop_footer
      %s33 = sadd.s32 1, %s29
    $region7: #{tpu_custom_call.1} parent=1 // loop_footer_branch
      %28 = sbr.rel target = $region3
    $region8: #{tpu_custom_call.1} parent=1 // loop_exit
      _
    %613 = vsyncpa [#allocation8], 1
    %s614 = scalar_lea.sflag [#allocation8], 1
    %615 = vsyncpa %s614, 1
    %616 = vsyncpa [#allocation11], 1
    %s617 = scalar_lea.sflag [#allocation11], 1
    %618 = vsyncpa %s617, 1
    %619 = vsyncpa [#allocation9], 1
    %s620 = scalar_lea.sflag [#allocation9], 1
    %621 = vsyncpa %s620, 1

</llo_original>
